<compile_context>
chip_gen: v7x
topology: tpu7x:2x2x1
jax: 0.10.0
libtpu: 0.0.40
codegen_flags: <defaults>
</compile_context>

<pallas_src>
import jax
import jax.numpy as jnp
from jax.experimental import pallas as pl
from jax.experimental.pallas import tpu as pltpu


# --------------------------------------------------------------------------- kernel
def gnn_kernel(feat_ref,   # (G, N, F)  f32  — G graphs: row 0 target, rows 1..N-1 path states
               aw1_ref,    # (2F, 128)  bf16 — attention Linear(2F,128) weight
               avec_ref,   # (3, 128)   f32  — rows: attn bias1, attn W2^T, attn bias2 (bcast)
               w2_ref,     # (2F, 2F)   bf16 — [gate W | update1 W] fused
               w3_ref,     # (F, F)     bf16 — update2 W
               b2_ref,     # (3, F)     f32  — rows: gate b, update1 b, update2 b
               out_ref):   # (G, N, F)  f32  — full block: updated target + pass-through paths
    feats = feat_ref[...]                              # (G, N, F) f32
    G, N, F = feats.shape
    H = avec_ref.shape[1]                              # attention hidden = 128

    targets = feats[:, 0, :]                           # (G, F)
    flat = feats.reshape(G * N, F)                     # layout-preserving merge (N == 8)

    flat_bf = flat.astype(jnp.bfloat16)
    tgt_bf = targets.astype(jnp.bfloat16)

    avec = avec_ref[...]                               # (3, 128) f32
    b_a1 = avec[0:1, :]                                # attention layer-1 bias
    w_a2 = avec[1:2, :]                                # attention layer-2 weight (as a row)
    b_a2 = avec[2:3, 0:1]                              # attention layer-2 bias (scalar)

    # ---- attention MLP on concat([target, source_i]) for every (graph, row) ----
    # concat-matmul split: [t, s] @ W1 == t @ W1[:F] + s @ W1[F:]
    h_src = jnp.dot(flat_bf, aw1_ref[F:2 * F, :],
                    preferred_element_type=jnp.float32)            # (G*N, 128) — one big push
    h_tgt = jnp.dot(tgt_bf, aw1_ref[0:F, :],
                    preferred_element_type=jnp.float32)            # (G, 128)   — one push for all graphs
    h = h_src.reshape(G, N, H) + h_tgt.reshape(G, 1, H) + b_a1.reshape(1, 1, H)
    h = jnp.maximum(h, 0.0)                                        # ReLU, (G, N, 128) f32

    # Linear(128 -> 1) as a lane reduction (avoids a lane-1 MXU output).
    scores = jnp.sum(h * w_a2.reshape(1, 1, H), axis=-1, keepdims=True)
    scores = scores + b_a2.reshape(1, 1, 1)                        # (G, N, 1)
    attn = jax.nn.sigmoid(scores)

    # torch only loops over path states (rows 1..N-1): zero the target row's weight.
    row = jax.lax.broadcasted_iota(jnp.int32, (G, N, 1), 1)
    attn = jnp.where(row >= 1, attn, 0.0)
    s = jnp.sum(attn, axis=1, keepdims=True)                       # (G, 1, 1)
    attn = attn / jnp.where(s > 0.0, s, 1.0)                       # normalize when sum > 0

    # weighted aggregation of path states (row 0 contributes weight 0)
    agg = jnp.sum(feats * attn, axis=1)                            # (G, F) f32
    agg_bf = agg.astype(jnp.bfloat16)

    # ---- stage 2: combined = concat([target, agg]); gate & update-L1 in ONE fused GEMM (M=G)
    pre = (jnp.dot(tgt_bf, w2_ref[0:F, :], preferred_element_type=jnp.float32)
           + jnp.dot(agg_bf, w2_ref[F:2 * F, :], preferred_element_type=jnp.float32))  # (G, 2F)
    biases = b2_ref[...]                                           # (3, F)
    gate = jax.nn.sigmoid(pre[:, 0:F] + biases[0:1, :])            # (G, F)
    uh = jnp.maximum(pre[:, F:2 * F] + biases[1:2, :], 0.0)        # (G, F)
    upd = (jnp.dot(uh.astype(jnp.bfloat16), w3_ref[...],
                   preferred_element_type=jnp.float32) + biases[2:3, :])               # (G, F)

    new_tgt = targets + gate * upd                                 # (G, F)

    # dense, unmasked full-block writeback: target row updated, path rows pass through
    out_ref[...] = jnp.where(row == 0, new_tgt.reshape(G, 1, F), feats)


# --------------------------------------------------------------------------- wrapper
def _graphs_per_step(batch):
    """Largest divisor of `batch` that still leaves >= 2 grid steps, so the
    "parallel" grid axis can be sharded across v7x's two TensorCores.  On
    v5e/v6e the grid is a sequential loop, so fewer/bigger steps are also fine."""
    for g in range(batch // 2, 0, -1):
        if batch % g == 0:
            return g
    return max(batch, 1)


def gnn_layer(features, params):
    """features: (B, N, F) float32 — B graphs; row 0 of each graph is the target node.
    Returns (B, N, F) with row 0 of every graph updated; other rows pass through."""
    B, N, F = features.shape
    if N <= 1:                              # static early-out, matches torch semantics
        return features
    aw1, avec, w2, w3, b2 = params
    G = _graphs_per_step(B)                 # graphs per grid step (divides B)

    def resident(a):                        # constant index_map -> DMA'd once, stays in VMEM
        return pl.BlockSpec(a.shape, lambda i: (0, 0))

    grid_spec = pltpu.PrefetchScalarGridSpec(
        num_scalar_prefetch=0,
        grid=(B // G,),
        in_specs=[
            pl.BlockSpec((G, N, F), lambda i: (i, 0, 0)),           # G graphs per step
            resident(aw1),
            resident(avec),
            resident(w2),
            resident(w3),
            resident(b2),
        ],
        out_specs=pl.BlockSpec((G, N, F), lambda i: (i, 0, 0)),     # dense full-block writeback
    )
    return pl.pallas_call(
        gnn_kernel,
        out_shape=jax.ShapeDtypeStruct((B, N, F), features.dtype),
        grid_spec=grid_spec,
        compiler_params=pltpu.CompilerParams(dimension_semantics=("parallel",)),
    )(features, aw1, avec, w2, w3, b2)


# --------------------------------------------------------------------------- params
def init_raw_params(key, feature_dim):
    """nn.Linear-style init (uniform ±1/sqrt(fan_in)); weights stored (in, out)."""
    def linear(k, fan_in, fan_out):
        kw, kb = jax.random.split(k)
        bound = 1.0 / jnp.sqrt(fan_in)
        w = jax.random.uniform(kw, (fan_in, fan_out), jnp.float32, -bound, bound)
        b = jax.random.uniform(kb, (fan_out,), jnp.float32, -bound, bound)
        return w, b

    F = feature_dim
    k = jax.random.split(key, 5)
    aw1, ab1 = linear(k[0], 2 * F, 128)   # attention layer 1
    aw2, ab2 = linear(k[1], 128, 1)       # attention layer 2
    uw1, ub1 = linear(k[2], 2 * F, F)     # update_net layer 1
    uw2, ub2 = linear(k[3], F, F)         # update_net layer 2
    gw, gb = linear(k[4], 2 * F, F)       # gate
    return (aw1, ab1, aw2, ab2, uw1, ub1, uw2, ub2, gw, gb)


def pack_params(raw):
    """Pack the 10 raw tensors into 5 kernel buffers (bf16 matmul weights, f32 biases)."""
    aw1, ab1, aw2, ab2, uw1, ub1, uw2, ub2, gw, gb = raw
    attn_w1 = aw1.astype(jnp.bfloat16)                               # (2F, 128)
    attn_vec = jnp.stack(                                            # (3, 128) f32
        [ab1, aw2[:, 0], jnp.full((128,), ab2[0], jnp.float32)], axis=0)
    w2 = jnp.concatenate([gw, uw1], axis=1).astype(jnp.bfloat16)     # (2F, 2F)  [gate | update1]
    w3 = uw2.astype(jnp.bfloat16)                                    # (F, F)
    b2 = jnp.stack([gb, ub1, ub2], axis=0)                           # (3, F)    f32
    return (attn_w1, attn_vec, w2, w3, b2)


# --------------------------------------------------------------------------- reference (pure JAX)
def gnn_layer_ref(feats, raw):
    """Single-graph reference mirroring the PyTorch module (matmul inputs cast to bf16
    to match the kernel's MXU dtype; accumulation and element-wise math in f32)."""
    aw1, ab1, aw2, ab2, uw1, ub1, uw2, ub2, gw, gb = raw
    N, F = feats.shape
    if N <= 1:
        return feats
    bf = jnp.bfloat16
    target = feats[0:1]
    paths = feats[1:]
    comb = jnp.concatenate([jnp.broadcast_to(target, paths.shape), paths], axis=1)
    h = jnp.maximum(jnp.dot(comb.astype(bf), aw1.astype(bf),
                            preferred_element_type=jnp.float32) + ab1, 0.0)
    attn = jax.nn.sigmoid(jnp.dot(h, aw2) + ab2)
    s = attn.sum()
    attn = jnp.where(s > 0, attn / s, attn)
    agg = (paths * attn).sum(axis=0, keepdims=True)
    comb2 = jnp.concatenate([target, agg], axis=1).astype(bf)
    gate = jax.nn.sigmoid(jnp.dot(comb2, gw.astype(bf), preferred_element_type=jnp.float32) + gb)
    uh = jnp.maximum(jnp.dot(comb2, uw1.astype(bf), preferred_element_type=jnp.float32) + ub1, 0.0)
    upd = jnp.dot(uh.astype(bf), uw2.astype(bf), preferred_element_type=jnp.float32) + ub2
    return jnp.concatenate([target + gate * upd, paths], axis=0)


# --------------------------------------------------------------------------- main
if __name__ == "__main__":
    FEATURE_DIM = 32
    N = 8       # 1 target node + 7 path states per graph
    B = 8       # 8 graphs -> 4 graphs per grid step, 2 parallel grid steps
    # TODO(synk): variable per-graph node counts (torch checks path_states.size(0) at
    # runtime) are handled statically here — every graph in a batch shares the same N.

    key = jax.random.PRNGKey(0)
    k_feat, k_par = jax.random.split(key)
    features = jax.random.normal(k_feat, (B, N, FEATURE_DIM), jnp.float32)
    raw = init_raw_params(k_par, FEATURE_DIM)
    params = pack_params(raw)

    ref = jax.vmap(lambda f: gnn_layer_ref(f, raw))(features)

    out = gnn_layer(features, params)
    out = jax.block_until_ready(out)

    assert out.shape == (B, N, FEATURE_DIM)
    # path-state rows must pass through bit-exactly
    assert jnp.array_equal(out[:, 1:], features[:, 1:]), "path rows were modified"
    # updated target rows vs pure-JAX reference (bf16 matmuls, f32 accumulation)
    assert jnp.allclose(out, ref, atol=2e-3, rtol=2e-3), "mismatch vs pure-JAX reference"

    print("KERNEL_OK")
</pallas_src>

<mosaic_0001>
module attributes {stable_mosaic.version = 11 : i64} {
  func.func @gnn_kernel(%arg0: i32, %arg1: memref<4x8x32xf32, #tpu.memory_space<vmem>>, %arg2: memref<64x128xbf16, #tpu.memory_space<vmem>>, %arg3: memref<3x128xf32, #tpu.memory_space<vmem>>, %arg4: memref<64x64xbf16, #tpu.memory_space<vmem>>, %arg5: memref<32x32xbf16, #tpu.memory_space<vmem>>, %arg6: memref<3x32xf32, #tpu.memory_space<vmem>>, %arg7: memref<4x8x32xf32, #tpu.memory_space<vmem>>) attributes {dimension_semantics = [#tpu.dimension_semantics<parallel>], iteration_bounds = array<i64: 2>, scalar_prefetch = 0 : i64, scratch_operands = 0 : i64, tpu.core_type = #tpu.core_type<tc>, window_params = [{transform_indices = @transform_0, window_bounds = array<i64: 4, 8, 32>}, {pipeline_mode = #tpu.pipeline_mode<synchronous>, transform_indices = @transform_1, window_bounds = array<i64: 64, 128>}, {pipeline_mode = #tpu.pipeline_mode<synchronous>, transform_indices = @transform_2, window_bounds = array<i64: 3, 128>}, {pipeline_mode = #tpu.pipeline_mode<synchronous>, transform_indices = @transform_3, window_bounds = array<i64: 64, 64>}, {pipeline_mode = #tpu.pipeline_mode<synchronous>, transform_indices = @transform_4, window_bounds = array<i64: 32, 32>}, {pipeline_mode = #tpu.pipeline_mode<synchronous>, transform_indices = @transform_5, window_bounds = array<i64: 3, 32>}, {transform_indices = @transform_6, window_bounds = array<i64: 4, 8, 32>}]} {
    %c0 = arith.constant 0 : index
    %c0_0 = arith.constant 0 : index
    %c0_1 = arith.constant 0 : index
    %0 = vector.load %arg1[%c0, %c0_0, %c0_1] : memref<4x8x32xf32, #tpu.memory_space<vmem>>, vector<4x8x32xf32>
    %1 = vector.extract_strided_slice %0 {offsets = [0, 0, 0], sizes = [4, 1, 32], strides = [1, 1, 1]} : vector<4x8x32xf32> to vector<4x1x32xf32>
    %2 = vector.shape_cast %1 : vector<4x1x32xf32> to vector<4x32xf32>
    %3 = vector.shape_cast %0 : vector<4x8x32xf32> to vector<32x32xf32>
    %4 = arith.truncf %3 : vector<32x32xf32> to vector<32x32xbf16>
    %5 = arith.truncf %2 : vector<4x32xf32> to vector<4x32xbf16>
    %c0_2 = arith.constant 0 : index
    %c0_3 = arith.constant 0 : index
    %6 = vector.load %arg3[%c0_2, %c0_3] : memref<3x128xf32, #tpu.memory_space<vmem>>, vector<3x128xf32>
    %7 = vector.extract_strided_slice %6 {offsets = [0, 0], sizes = [1, 128], strides = [1, 1]} : vector<3x128xf32> to vector<1x128xf32>
    %8 = vector.extract_strided_slice %6 {offsets = [1, 0], sizes = [1, 128], strides = [1, 1]} : vector<3x128xf32> to vector<1x128xf32>
    %9 = vector.extract_strided_slice %6 {offsets = [2, 0], sizes = [1, 1], strides = [1, 1]} : vector<3x128xf32> to vector<1x1xf32>
    %c32 = arith.constant 32 : index
    %c0_4 = arith.constant 0 : index
    %10 = vector.load %arg2[%c32, %c0_4] : memref<64x128xbf16, #tpu.memory_space<vmem>>, vector<32x128xbf16>
    %cst = arith.constant dense<0.000000e+00> : vector<32x128xf32>
    %11 = tpu.matmul %4, %10, %cst {dimension_numbers = #tpu.dot_dimension_numbers<[1], [0], [0], [1], [0, 0, 1, 1], [], []>} : vector<32x32xbf16>, vector<32x128xbf16>, vector<32x128xf32> -> vector<32x128xf32>
    %c0_5 = arith.constant 0 : index
    %c0_6 = arith.constant 0 : index
    %12 = vector.load %arg2[%c0_5, %c0_6] : memref<64x128xbf16, #tpu.memory_space<vmem>>, vector<32x128xbf16>
    %cst_7 = arith.constant dense<0.000000e+00> : vector<4x128xf32>
    %13 = tpu.matmul %5, %12, %cst_7 {dimension_numbers = #tpu.dot_dimension_numbers<[1], [0], [0], [1], [0, 0, 1, 1], [], []>} : vector<4x32xbf16>, vector<32x128xbf16>, vector<4x128xf32> -> vector<4x128xf32>
    %14 = vector.shape_cast %11 : vector<32x128xf32> to vector<4x8x128xf32>
    %15 = vector.shape_cast %13 : vector<4x128xf32> to vector<4x1x128xf32>
    %16 = vector.broadcast %15 : vector<4x1x128xf32> to vector<4x8x128xf32>
    %17 = arith.addf %14, %16 : vector<4x8x128xf32>
    %18 = vector.shape_cast %7 : vector<1x128xf32> to vector<1x1x128xf32>
    %19 = vector.broadcast %18 : vector<1x1x128xf32> to vector<4x8x128xf32>
    %20 = arith.addf %17, %19 : vector<4x8x128xf32>
    %cst_8 = arith.constant 0.000000e+00 : f32
    %21 = vector.broadcast %cst_8 : f32 to vector<4x8x128xf32>
    %22 = arith.maximumf %20, %21 : vector<4x8x128xf32>
    %23 = vector.shape_cast %8 : vector<1x128xf32> to vector<1x1x128xf32>
    %24 = vector.broadcast %23 : vector<1x1x128xf32> to vector<4x8x128xf32>
    %25 = arith.mulf %22, %24 : vector<4x8x128xf32>
    %cst_9 = arith.constant dense<0.000000e+00> : vector<4x8xf32>
    %26 = vector.multi_reduction <add>, %25, %cst_9 [2] : vector<4x8x128xf32> to vector<4x8xf32>
    %27 = vector.shape_cast %26 : vector<4x8xf32> to vector<4x8x1xf32>
    %28 = vector.shape_cast %9 : vector<1x1xf32> to vector<1x1x1xf32>
    %29 = vector.broadcast %28 : vector<1x1x1xf32> to vector<4x8x1xf32>
    %30 = arith.addf %27, %29 : vector<4x8x1xf32>
    %31 = arith.negf %30 : vector<4x8x1xf32>
    %32 = math.exp %31 : vector<4x8x1xf32>
    %cst_10 = arith.constant 1.000000e+00 : f32
    %33 = vector.broadcast %cst_10 : f32 to vector<4x8x1xf32>
    %34 = arith.addf %33, %32 : vector<4x8x1xf32>
    %35 = arith.divf %33, %34 : vector<4x8x1xf32>
    %36 = tpu.iota {dimensions = array<i32: 1>} : vector<4x8x1xi32>
    %c1_i32 = arith.constant 1 : i32
    %37 = vector.broadcast %c1_i32 : i32 to vector<4x8x1xi32>
    %38 = arith.cmpi sge, %36, %37 : vector<4x8x1xi32>
    %cst_11 = arith.constant 0.000000e+00 : f32
    %39 = vector.broadcast %cst_11 : f32 to vector<4x8x1xf32>
    %40 = arith.select %38, %35, %39 : vector<4x8x1xi1>, vector<4x8x1xf32>
    %cst_12 = arith.constant dense<0.000000e+00> : vector<4x1xf32>
    %41 = vector.multi_reduction <add>, %40, %cst_12 [1] : vector<4x8x1xf32> to vector<4x1xf32>
    %42 = vector.shape_cast %41 : vector<4x1xf32> to vector<4x1x1xf32>
    %cst_13 = arith.constant 0.000000e+00 : f32
    %43 = vector.broadcast %cst_13 : f32 to vector<4x1x1xf32>
    %44 = arith.cmpf ogt, %42, %43 : vector<4x1x1xf32>
    %cst_14 = arith.constant 1.000000e+00 : f32
    %45 = vector.broadcast %cst_14 : f32 to vector<4x1x1xf32>
    %46 = arith.select %44, %42, %45 : vector<4x1x1xi1>, vector<4x1x1xf32>
    %47 = vector.broadcast %46 : vector<4x1x1xf32> to vector<4x8x1xf32>
    %48 = arith.divf %40, %47 : vector<4x8x1xf32>
    %49 = vector.broadcast %48 : vector<4x8x1xf32> to vector<4x8x32xf32>
    %50 = arith.mulf %0, %49 : vector<4x8x32xf32>
    %cst_15 = arith.constant dense<0.000000e+00> : vector<4x32xf32>
    %51 = vector.multi_reduction <add>, %50, %cst_15 [1] : vector<4x8x32xf32> to vector<4x32xf32>
    %52 = arith.truncf %51 : vector<4x32xf32> to vector<4x32xbf16>
    %c0_16 = arith.constant 0 : index
    %c0_17 = arith.constant 0 : index
    %53 = vector.load %arg4[%c0_16, %c0_17] : memref<64x64xbf16, #tpu.memory_space<vmem>>, vector<32x64xbf16>
    %cst_18 = arith.constant dense<0.000000e+00> : vector<4x64xf32>
    %54 = tpu.matmul %5, %53, %cst_18 {dimension_numbers = #tpu.dot_dimension_numbers<[1], [0], [0], [1], [0, 0, 1, 1], [], []>} : vector<4x32xbf16>, vector<32x64xbf16>, vector<4x64xf32> -> vector<4x64xf32>
    %c32_19 = arith.constant 32 : index
    %c0_20 = arith.constant 0 : index
    %55 = vector.load %arg4[%c32_19, %c0_20] : memref<64x64xbf16, #tpu.memory_space<vmem>>, vector<32x64xbf16>
    %cst_21 = arith.constant dense<0.000000e+00> : vector<4x64xf32>
    %56 = tpu.matmul %52, %55, %cst_21 {dimension_numbers = #tpu.dot_dimension_numbers<[1], [0], [0], [1], [0, 0, 1, 1], [], []>} : vector<4x32xbf16>, vector<32x64xbf16>, vector<4x64xf32> -> vector<4x64xf32>
    %57 = arith.addf %54, %56 : vector<4x64xf32>
    %c0_22 = arith.constant 0 : index
    %c0_23 = arith.constant 0 : index
    %58 = vector.load %arg6[%c0_22, %c0_23] : memref<3x32xf32, #tpu.memory_space<vmem>>, vector<3x32xf32>
    %59 = vector.extract_strided_slice %57 {offsets = [0, 0], sizes = [4, 32], strides = [1, 1]} : vector<4x64xf32> to vector<4x32xf32>
    %60 = vector.extract_strided_slice %58 {offsets = [0, 0], sizes = [1, 32], strides = [1, 1]} : vector<3x32xf32> to vector<1x32xf32>
    %61 = vector.broadcast %60 : vector<1x32xf32> to vector<4x32xf32>
    %62 = arith.addf %59, %61 : vector<4x32xf32>
    %63 = arith.negf %62 : vector<4x32xf32>
    %64 = math.exp %63 : vector<4x32xf32>
    %cst_24 = arith.constant 1.000000e+00 : f32
    %65 = vector.broadcast %cst_24 : f32 to vector<4x32xf32>
    %66 = arith.addf %65, %64 : vector<4x32xf32>
    %67 = arith.divf %65, %66 : vector<4x32xf32>
    %68 = vector.extract_strided_slice %57 {offsets = [0, 32], sizes = [4, 32], strides = [1, 1]} : vector<4x64xf32> to vector<4x32xf32>
    %69 = vector.extract_strided_slice %58 {offsets = [1, 0], sizes = [1, 32], strides = [1, 1]} : vector<3x32xf32> to vector<1x32xf32>
    %70 = vector.broadcast %69 : vector<1x32xf32> to vector<4x32xf32>
    %71 = arith.addf %68, %70 : vector<4x32xf32>
    %cst_25 = arith.constant 0.000000e+00 : f32
    %72 = vector.broadcast %cst_25 : f32 to vector<4x32xf32>
    %73 = arith.maximumf %71, %72 : vector<4x32xf32>
    %74 = arith.truncf %73 : vector<4x32xf32> to vector<4x32xbf16>
    %c0_26 = arith.constant 0 : index
    %c0_27 = arith.constant 0 : index
    %75 = vector.load %arg5[%c0_26, %c0_27] : memref<32x32xbf16, #tpu.memory_space<vmem>>, vector<32x32xbf16>
    %cst_28 = arith.constant dense<0.000000e+00> : vector<4x32xf32>
    %76 = tpu.matmul %74, %75, %cst_28 {dimension_numbers = #tpu.dot_dimension_numbers<[1], [0], [0], [1], [0, 0, 1, 1], [], []>} : vector<4x32xbf16>, vector<32x32xbf16>, vector<4x32xf32> -> vector<4x32xf32>
    %77 = vector.extract_strided_slice %58 {offsets = [2, 0], sizes = [1, 32], strides = [1, 1]} : vector<3x32xf32> to vector<1x32xf32>
    %78 = vector.broadcast %77 : vector<1x32xf32> to vector<4x32xf32>
    %79 = arith.addf %76, %78 : vector<4x32xf32>
    %80 = arith.mulf %67, %79 : vector<4x32xf32>
    %81 = arith.addf %2, %80 : vector<4x32xf32>
    %c0_i32 = arith.constant 0 : i32
    %82 = vector.broadcast %c0_i32 : i32 to vector<4x8x1xi32>
    %83 = arith.cmpi eq, %36, %82 : vector<4x8x1xi32>
    %84 = vector.shape_cast %81 : vector<4x32xf32> to vector<4x1x32xf32>
    %85 = vector.shape_cast %83 : vector<4x8x1xi1> to vector<4x8x1xi1>
    %86 = vector.broadcast %85 : vector<4x8x1xi1> to vector<4x8x32xi1>
    %87 = vector.shape_cast %84 : vector<4x1x32xf32> to vector<4x1x32xf32>
    %88 = vector.broadcast %87 : vector<4x1x32xf32> to vector<4x8x32xf32>
    %89 = arith.select %86, %88, %0 : vector<4x8x32xi1>, vector<4x8x32xf32>
    %c0_29 = arith.constant 0 : index
    %c0_30 = arith.constant 0 : index
    %c0_31 = arith.constant 0 : index
    %90 = vector.load %arg7[%c0_29, %c0_30, %c0_31] : memref<4x8x32xf32, #tpu.memory_space<vmem>>, vector<4x8x32xf32>
    tpu.vector_store %arg7[%c0_29, %c0_30, %c0_31], %89 {strides = array<i32>} : memref<4x8x32xf32, #tpu.memory_space<vmem>>, vector<4x8x32xf32>,
    return
  }
  func.func @transform_0(%arg0: i32) -> (i32, i32, i32) {
    %c0_i32 = arith.constant 0 : i32
    %c0_i32_0 = arith.constant 0 : i32
    %c0_i32_1 = arith.constant 0 : i32
    return %arg0, %c0_i32, %c0_i32_0 : i32, i32, i32
  }
  func.func @transform_1(%arg0: i32) -> (i32, i32) {
    %c0_i32 = arith.constant 0 : i32
    %c0_i32_0 = arith.constant 0 : i32
    %c0_i32_1 = arith.constant 0 : i32
    return %c0_i32, %c0_i32_0 : i32, i32
  }
  func.func @transform_2(%arg0: i32) -> (i32, i32) {
    %c0_i32 = arith.constant 0 : i32
    %c0_i32_0 = arith.constant 0 : i32
    %c0_i32_1 = arith.constant 0 : i32
    return %c0_i32, %c0_i32_0 : i32, i32
  }
  func.func @transform_3(%arg0: i32) -> (i32, i32) {
    %c0_i32 = arith.constant 0 : i32
    %c0_i32_0 = arith.constant 0 : i32
    %c0_i32_1 = arith.constant 0 : i32
    return %c0_i32, %c0_i32_0 : i32, i32
  }
  func.func @transform_4(%arg0: i32) -> (i32, i32) {
    %c0_i32 = arith.constant 0 : i32
    %c0_i32_0 = arith.constant 0 : i32
    %c0_i32_1 = arith.constant 0 : i32
    return %c0_i32, %c0_i32_0 : i32, i32
  }
  func.func @transform_5(%arg0: i32) -> (i32, i32) {
    %c0_i32 = arith.constant 0 : i32
    %c0_i32_0 = arith.constant 0 : i32
    %c0_i32_1 = arith.constant 0 : i32
    return %c0_i32, %c0_i32_0 : i32, i32
  }
  func.func @transform_6(%arg0: i32) -> (i32, i32, i32) {
    %c0_i32 = arith.constant 0 : i32
    %c0_i32_0 = arith.constant 0 : i32
    %c0_i32_1 = arith.constant 0 : i32
    return %arg0, %c0_i32, %c0_i32_0 : i32, i32, i32
  }
}

</mosaic_0001>

<llo_original>
// kernel: tpu_custom_call.1
$region0: #{tpu_custom_call.1}
  #allocation0 [shape = 'u32[]', space=smem, size = 0x4, offset = 0x4, fixed_abs, tag = 'smem constant byte address 0x4 - core index']
  #allocation1 [shape = 'u32[144,128]{1,0:T(1,128)}', space=vmem, size = 0x12000, scoped, tag = 'internal scratch']
  %s0 = inlined_call_operand.hbm [shape: f32[8,8,32], index: 0, kind: input, shape index: {}]
  %s1 = inlined_call_operand.hbm [shape: bf16[64,128], index: 1, kind: input, shape index: {}]
  %s2 = inlined_call_operand.vmem [shape: f32[3,128], index: 2, kind: input, shape index: {}]
  %s3 = inlined_call_operand.hbm [shape: bf16[64,64], index: 3, kind: input, shape index: {}]
  %s4 = inlined_call_operand.hbm [shape: bf16[32,32], index: 4, kind: input, shape index: {}]
  %s5 = inlined_call_operand.vmem [shape: f32[3,32], index: 5, kind: input, shape index: {}]
  %s6 = inlined_call_operand.hbm [shape: f32[8,8,32], index: 6, kind: output, shape index: {}]
  %s7 = sld [smem:[#allocation0]]
  $region73: #{tpu_custom_call.1} parent=0
    _
  %s9 = ssub.s32 1, %s7
  %s10 = scalar_select 0, %s9, %s7
  $region1: #{tpu_custom_call.1} parent=0
    #allocation2 [shape = 'u8[32768]{0}', space=vmem, size = 0x8000, scoped, tag = 'input window, operand 0']
    #allocation3 [shape = 's32[2]{0}', space=sflag, size = 0x8, scoped, tag = 'scoped memory for tpu_custom_call.1']
    #allocation4 [shape = 's32[2]{0}', space=sflag, size = 0x8, scoped, tag = 'scoped memory for tpu_custom_call.1']
    #allocation5 [shape = 'u8[16384]{0}', space=vmem, size = 0x4000, scoped, tag = 'input window, operand 1, single buffered']
    #allocation6 [shape = 's32[1]{0}', space=sflag, size = 0x4, scoped, tag = 'scoped memory for tpu_custom_call.1']
    #allocation7 [shape = 'u8[16384]{0}', space=vmem, size = 0x4000, scoped, tag = 'input window, operand 3, single buffered']
    #allocation8 [shape = 'u8[8192]{0}', space=vmem, size = 0x2000, scoped, tag = 'input window, operand 4, single buffered']
    #allocation9 [shape = 's32[1]{0}', space=sflag, size = 0x4, scoped, tag = 'scoped memory for tpu_custom_call.1']
    #allocation10 [shape = 'u8[32768]{0}', space=vmem, size = 0x8000, scoped, tag = 'output window, operand 0']
    %11 = vsyncpa [#allocation3], 0
    %s12 = scalar_lea.sflag [#allocation3], 1
    %13 = vsyncpa %s12, 0
    %14 = vsyncpa [#allocation6], 0
    %15 = vsyncpa [#allocation9], 0
    %16 = vsyncpa [#allocation4], 0
    %s17 = scalar_lea.sflag [#allocation4], 1
    %18 = vsyncpa %s17, 0
    loop: start=0, step=1, limit=4
    $region2: #{tpu_custom_call.1} parent=1 // loop_pre_header
      _
    $region3: #{tpu_custom_call.1} parent=1 // loop_header
      %s20 = sphi 0, %s24
      %p21 = scmp.ge.s32.totalorder %s20, 4
      %s30 = sphi 0, %s32
      %s33 = sphi 0, %s30
      %s34 = sphi 0, %s33
      %s50 = sphi 0, %s34
      %s54 = sphi 0, %s54
      %s56 = sphi 0, %s54
      %s57 = sphi 0, %s56
      %s71 = sphi 0, %s57
      %s75 = sphi 0, %s75
      %s77 = sphi 0, %s75
      %s78 = sphi 0, %s77
      %s92 = sphi 0, %s78
      %s96 = sphi 0, %s96
      %s98 = sphi 0, %s96
      %s99 = sphi 0, %s98
      %s113 = sphi 0, %s99
      %s117 = sphi 0, %s117
      %s119 = sphi 0, %s117
      %s120 = sphi 0, %s119
      %s134 = sphi 0, %s120
      %s138 = sphi 0, %s138
      %s140 = sphi 0, %s138
      %s141 = sphi 0, %s140
      %s155 = sphi 0, %s141
      %s161 = sphi 0, %s163
      %s164 = sphi 0, %s161
      %s165 = sphi 0, %s164
      %s181 = sphi 0, %s165
    $region4: #{tpu_custom_call.1} parent=1 // loop_header_branch
      %23 = sbr.rel (%p21) target = $region8
    $region5: #{tpu_custom_call.1} parent=1 // loop_body
      %s25 = ssub.s32 %s20, 1
      %s26 = ssub.s32 %s20, 2
      %s27 = sadd.s32 %s20, 1
      %s28 = ssub.s32 %s20, %s27
      %p29 = scmp.eq.s32.totalorder %s28, 0
      %s31 = sadd.s32 %s30, 1
      %s32 = scalar_select %p29, %s30, %s31
      %p35 = pneg %p29
      %p36 = scmp.eq.s32.totalorder %s20, 1
      %p37 = por %p35, %p36
      %p38 = scmp.ne.s32.totalorder %s30, %s33
      %p39 = scmp.eq.s32.totalorder %s20, 0
      %p40 = por %p38, %p39
      %p41 = scmp.ne.s32.totalorder %s30, %s33
      %p42 = scmp.eq.s32.totalorder %s25, 1
      %p43 = por %p41, %p42
      %p44 = scmp.ne.s32.totalorder %s33, %s34
      %p45 = scmp.eq.s32.totalorder %s25, 0
      %p46 = por %p44, %p45
      %p47 = scmp.ne.s32.totalorder %s33, %s34
      %p48 = scmp.eq.s32.totalorder %s26, 1
      %p49 = por %p47, %p48
      %p51 = scmp.ne.s32.totalorder %s34, %s50
      %p52 = scmp.eq.s32.totalorder %s26, 0
      %p53 = por %p51, %p52
      %s55 = sadd.s32 %s54, 1
      %p58 = scmp.eq.s32.totalorder %s20, 1
      %p59 = scmp.ne.s32.totalorder %s54, %s56
      %p60 = scmp.eq.s32.totalorder %s20, 0
      %p61 = por %p59, %p60
      %p62 = scmp.ne.s32.totalorder %s54, %s56
      %p63 = scmp.eq.s32.totalorder %s25, 1
      %p64 = por %p62, %p63
      %p65 = scmp.ne.s32.totalorder %s56, %s57
      %p66 = scmp.eq.s32.totalorder %s25, 0
      %p67 = por %p65, %p66
      %p68 = scmp.ne.s32.totalorder %s56, %s57
      %p69 = scmp.eq.s32.totalorder %s26, 1
      %p70 = por %p68, %p69
      %p72 = scmp.ne.s32.totalorder %s57, %s71
      %p73 = scmp.eq.s32.totalorder %s26, 0
      %p74 = por %p72, %p73
      %s76 = sadd.s32 %s75, 1
      %p79 = scmp.eq.s32.totalorder %s20, 1
      %p80 = scmp.ne.s32.totalorder %s75, %s77
      %p81 = scmp.eq.s32.totalorder %s20, 0
      %p82 = por %p80, %p81
      %p83 = scmp.ne.s32.totalorder %s75, %s77
      %p84 = scmp.eq.s32.totalorder %s25, 1
      %p85 = por %p83, %p84
      %p86 = scmp.ne.s32.totalorder %s77, %s78
      %p87 = scmp.eq.s32.totalorder %s25, 0
      %p88 = por %p86, %p87
      %p89 = scmp.ne.s32.totalorder %s77, %s78
      %p90 = scmp.eq.s32.totalorder %s26, 1
      %p91 = por %p89, %p90
      %p93 = scmp.ne.s32.totalorder %s78, %s92
      %p94 = scmp.eq.s32.totalorder %s26, 0
      %p95 = por %p93, %p94
      %s97 = sadd.s32 %s96, 1
      %p100 = scmp.eq.s32.totalorder %s20, 1
      %p101 = scmp.ne.s32.totalorder %s96, %s98
      %p102 = scmp.eq.s32.totalorder %s20, 0
      %p103 = por %p101, %p102
      %p104 = scmp.ne.s32.totalorder %s96, %s98
      %p105 = scmp.eq.s32.totalorder %s25, 1
      %p106 = por %p104, %p105
      %p107 = scmp.ne.s32.totalorder %s98, %s99
      %p108 = scmp.eq.s32.totalorder %s25, 0
      %p109 = por %p107, %p108
      %p110 = scmp.ne.s32.totalorder %s98, %s99
      %p111 = scmp.eq.s32.totalorder %s26, 1
      %p112 = por %p110, %p111
      %p114 = scmp.ne.s32.totalorder %s99, %s113
      %p115 = scmp.eq.s32.totalorder %s26, 0
      %p116 = por %p114, %p115
      %s118 = sadd.s32 %s117, 1
      %p121 = scmp.eq.s32.totalorder %s20, 1
      %p122 = scmp.ne.s32.totalorder %s117, %s119
      %p123 = scmp.eq.s32.totalorder %s20, 0
      %p124 = por %p122, %p123
      %p125 = scmp.ne.s32.totalorder %s117, %s119
      %p126 = scmp.eq.s32.totalorder %s25, 1
      %p127 = por %p125, %p126
      %p128 = scmp.ne.s32.totalorder %s119, %s120
      %p129 = scmp.eq.s32.totalorder %s25, 0
      %p130 = por %p128, %p129
      %p131 = scmp.ne.s32.totalorder %s119, %s120
      %p132 = scmp.eq.s32.totalorder %s26, 1
      %p133 = por %p131, %p132
      %p135 = scmp.ne.s32.totalorder %s120, %s134
      %p136 = scmp.eq.s32.totalorder %s26, 0
      %p137 = por %p135, %p136
      %s139 = sadd.s32 %s138, 1
      %p142 = scmp.eq.s32.totalorder %s20, 1
      %p143 = scmp.ne.s32.totalorder %s138, %s140
      %p144 = scmp.eq.s32.totalorder %s20, 0
      %p145 = por %p143, %p144
      %p146 = scmp.ne.s32.totalorder %s138, %s140
      %p147 = scmp.eq.s32.totalorder %s25, 1
      %p148 = por %p146, %p147
      %p149 = scmp.ne.s32.totalorder %s140, %s141
      %p150 = scmp.eq.s32.totalorder %s25, 0
      %p151 = por %p149, %p150
      %p152 = scmp.ne.s32.totalorder %s140, %s141
      %p153 = scmp.eq.s32.totalorder %s26, 1
      %p154 = por %p152, %p153
      %p156 = scmp.ne.s32.totalorder %s141, %s155
      %p157 = scmp.eq.s32.totalorder %s26, 0
      %p158 = por %p156, %p157
      %s159 = ssub.s32 %s20, %s27
      %p160 = scmp.eq.s32.totalorder %s159, 0
      %s162 = sadd.s32 %s161, 1
      %s163 = scalar_select %p160, %s161, %s162
      %p166 = pneg %p160
      %p167 = scmp.eq.s32.totalorder %s20, 1
      %p168 = por %p166, %p167
      %p169 = scmp.ne.s32.totalorder %s161, %s164
      %p170 = scmp.eq.s32.totalorder %s20, 0
      %p171 = por %p169, %p170
      %p172 = scmp.ne.s32.totalorder %s161, %s164
      %p173 = scmp.eq.s32.totalorder %s25, 1
      %p174 = por %p172, %p173
      %p175 = scmp.ne.s32.totalorder %s164, %s165
      %p176 = scmp.eq.s32.totalorder %s25, 0
      %p177 = por %p175, %p176
      %p178 = scmp.ne.s32.totalorder %s164, %s165
      %p179 = scmp.eq.s32.totalorder %s26, 1
      %p180 = por %p178, %p179
      %p182 = scmp.ne.s32.totalorder %s165, %s181
      %p183 = scmp.eq.s32.totalorder %s26, 0
      %p184 = por %p182, %p183
      %p185 = scmp.le.s32.totalorder 1, %s20
      %p186 = scmp.lt.s32.totalorder %s20, 3
      %p187 = pnand %p185, %p186
      %p188 = pneg %p187
      // Predicated region
      $region9: #{tpu_custom_call.1} parent=5 // pred_check
        _
      $region10: #{tpu_custom_call.1} parent=5 // pred_check_branch
        %190 = sbr.rel (%p187) target = $region12
      $region11: #{tpu_custom_call.1} parent=5 // pred_region
        %s191 = ssub.s32 %s20, 1
        // Predicated region
        $region13: #{tpu_custom_call.1} parent=11 // pred_check
          %p192 = pneg %p67
        $region14: #{tpu_custom_call.1} parent=11 // pred_check_branch
          %194 = sbr.rel (%p192) target = $region16
        $region15: #{tpu_custom_call.1} parent=11 // pred_region
          %s196 = ssub.s32 512, 512
          %197 = vsyncadd [#allocation6], %s196
          %s198 = sshll.u32 [#allocation5], 4
          %s199 = int_to_ptr.vmem [resolvable:$true] %s198
          %204 = dma.hbm_to_vmem [thread:$0]  %s1, 512, %s199, [#allocation6], 64, 64, 4
        $region16: #{tpu_custom_call.1} parent=11 // pred_fallthru
          _
        // Predicated region
        $region17: #{tpu_custom_call.1} parent=11 // pred_check
          %p205 = pneg %p88
        $region18: #{tpu_custom_call.1} parent=11 // pred_check_branch
          %207 = sbr.rel (%p205) target = $region20
        $region19: #{tpu_custom_call.1} parent=11 // pred_region
          _
        $region20: #{tpu_custom_call.1} parent=11 // pred_fallthru
          _
        // Predicated region
        $region21: #{tpu_custom_call.1} parent=11 // pred_check
          %p208 = pneg %p109
        $region22: #{tpu_custom_call.1} parent=11 // pred_check_branch
          %210 = sbr.rel (%p208) target = $region24
        $region23: #{tpu_custom_call.1} parent=11 // pred_region
          %s212 = ssub.s32 512, 512
          %213 = vsyncadd [#allocation6], %s212
          %s214 = sshll.u32 [#allocation7], 4
          %s215 = int_to_ptr.vmem [resolvable:$true] %s214
          %220 = dma.hbm_to_vmem [thread:$0]  %s3, 512, %s215, [#allocation6], 64, 64, 4
        $region24: #{tpu_custom_call.1} parent=11 // pred_fallthru
          _
        // Predicated region
        $region25: #{tpu_custom_call.1} parent=11 // pred_check
          %p221 = pneg %p130
        $region26: #{tpu_custom_call.1} parent=11 // pred_check_branch
          %223 = sbr.rel (%p221) target = $region28
        $region27: #{tpu_custom_call.1} parent=11 // pred_region
          %s225 = ssub.s32 256, 256
          %226 = vsyncadd [#allocation9], %s225
          %s227 = sshll.u32 [#allocation8], 4
          %s228 = int_to_ptr.vmem [resolvable:$true] %s227
          %233 = dma.hbm_to_vmem [thread:$0]  %s4, 256, %s228, [#allocation9], 64, 64, 4
        $region28: #{tpu_custom_call.1} parent=11 // pred_fallthru
          _
        // Predicated region
        $region29: #{tpu_custom_call.1} parent=11 // pred_check
          %p234 = pneg %p151
        $region30: #{tpu_custom_call.1} parent=11 // pred_check_branch
          %236 = sbr.rel (%p234) target = $region32
        $region31: #{tpu_custom_call.1} parent=11 // pred_region
          _
        $region32: #{tpu_custom_call.1} parent=11 // pred_fallthru
          _
      $region12: #{tpu_custom_call.1} parent=5 // pred_fallthru
        _
      %p237 = scmp.lt.s32.totalorder %s20, 2
      // Predicated region
      $region33: #{tpu_custom_call.1} parent=5 // pred_check
        %p238 = pneg %p237
      $region34: #{tpu_custom_call.1} parent=5 // pred_check_branch
        %240 = sbr.rel (%p238) target = $region36
      $region35: #{tpu_custom_call.1} parent=5 // pred_region
        // Predicated region
        $region37: #{tpu_custom_call.1} parent=35 // pred_check
          %p241 = pneg %p40
        $region38: #{tpu_custom_call.1} parent=35 // pred_check_branch
          %243 = sbr.rel (%p241) target = $region40
        $region39: #{tpu_custom_call.1} parent=35 // pred_region
          %s244 = sand.u32 %s30, 1
          %s245 = scalar_lea.sflag [#allocation3], %s244
          %s246 = sand.u32 %s30, 1
          %s247 = smul.addr %s246, 32
          %s248 = scalar_lea.vmem [#allocation2], %s247
          %s249 = smul.u32 4, %s20
          %s251 = ssub.s32 512, 512
          %252 = vsyncadd %s245, %s251
          %s253 = smul.addr %s249, 128
          %s254 = scalar_lea.hbm %s0, %s253
          %s255 = sshll.u32 %s248, 4
          %s256 = int_to_ptr.vmem [resolvable:$true] %s255
          %261 = dma.hbm_to_vmem [thread:$0]  %s254, 512, %s256, %s245, 128, 128, 8
        $region40: #{tpu_custom_call.1} parent=35 // pred_fallthru
          _
      $region36: #{tpu_custom_call.1} parent=5 // pred_fallthru
        _
      %p262 = scmp.le.s32.totalorder 1, %s20
      %p263 = scmp.lt.s32.totalorder %s20, 3
      %p264 = pnand %p262, %p263
      %p265 = pneg %p264
      // Predicated region
      $region41: #{tpu_custom_call.1} parent=5 // pred_check
        _
      $region42: #{tpu_custom_call.1} parent=5 // pred_check_branch
        %267 = sbr.rel (%p264) target = $region44
      $region43: #{tpu_custom_call.1} parent=5 // pred_region
        %s268 = ssub.s32 %s20, 1
        %s269 = sand.u32 %s33, 1
        %s270 = scalar_lea.sflag [#allocation3], %s269
        %s271 = sand.u32 %s33, 1
        %s272 = smul.addr %s271, 32
        %s273 = scalar_lea.vmem [#allocation2], %s272
        // Predicated region
        $region45: #{tpu_custom_call.1} parent=43 // pred_check
          %p274 = pneg %p46
        $region46: #{tpu_custom_call.1} parent=43 // pred_check_branch
          %276 = sbr.rel (%p274) target = $region48
        $region47: #{tpu_custom_call.1} parent=43 // pred_region
          %277 = dma.done %s270, 512
        $region48: #{tpu_custom_call.1} parent=43 // pred_fallthru
          _
        // Predicated region
        $region49: #{tpu_custom_call.1} parent=43 // pred_check
          %p278 = pneg %p67
        $region50: #{tpu_custom_call.1} parent=43 // pred_check_branch
          %280 = sbr.rel (%p278) target = $region52
        $region51: #{tpu_custom_call.1} parent=43 // pred_region
          %281 = dma.done [#allocation6], 512
        $region52: #{tpu_custom_call.1} parent=43 // pred_fallthru
          _
        // Predicated region
        $region53: #{tpu_custom_call.1} parent=43 // pred_check
          %p282 = pneg %p109
        $region54: #{tpu_custom_call.1} parent=43 // pred_check_branch
          %284 = sbr.rel (%p282) target = $region56
        $region55: #{tpu_custom_call.1} parent=43 // pred_region
          %285 = dma.done [#allocation6], 512
        $region56: #{tpu_custom_call.1} parent=43 // pred_fallthru
          _
        // Predicated region
        $region57: #{tpu_custom_call.1} parent=43 // pred_check
          %p286 = pneg %p130
        $region58: #{tpu_custom_call.1} parent=43 // pred_check_branch
          %288 = sbr.rel (%p286) target = $region60
        $region59: #{tpu_custom_call.1} parent=43 // pred_region
          %289 = dma.done [#allocation9], 256
        $region60: #{tpu_custom_call.1} parent=43 // pred_fallthru
          _
        %s290 = sand.u32 %s33, 1
        %s291 = scalar_lea.sflag [#allocation3], %s290
        %s292 = sand.u32 %s33, 1
        %s293 = smul.addr %s292, 32
        %s294 = scalar_lea.vmem [#allocation2], %s293
        %p295 = pneg %p46
        %p296 = pneg %p43
        %p297 = pneg %p67
        %p298 = pneg %p64
        %p299 = pneg %p88
        %p300 = pneg %p85
        %p301 = pneg %p109
        %p302 = pneg %p106
        %p303 = pneg %p130
        %p304 = pneg %p127
        %p305 = pneg %p151
        %p306 = pneg %p148
        %p307 = pneg %p177
        %p308 = pneg %p174
        %s309 = sand.u32 %s164, 1
        %s310 = scalar_lea.sflag [#allocation4], %s309
        %s311 = sand.u32 %s164, 1
        %s312 = smul.addr %s311, 32
        %s313 = scalar_lea.vmem [#allocation10], %s312
        %s314 = smul.u32 4, %s25
        %s315 = smul.u32 4, %s25
        %v317 = vld [vmem:[%s273] sm:$0xff]
        %v318 = vld [vmem:[%s273 + $0x8] sm:$0xff]
        %v319 = vld [vmem:[%s273 + $0x10] sm:$0xff]
        %v320 = vld [vmem:[%s273 + $0x18] sm:$0xff]
        %v321 = vpack.c.bf16 %v318, %v317
        %v322 = vpack.c.bf16 %v320, %v319
        %v323 = vpack.c.bf16 %v317, %v317
        %v324 = vpack.c.bf16 %v318, %v318
        %v325 = vpack.c.bf16 %v319, %v319
        %v326 = vpack.c.bf16 %v320, %v320
        %v327 = vld [vmem:[%s2] sm:$0x7]
        %v328 = vld [vmem:[#allocation5 + $0x10] sm:$0xf]
        %v329 = vld [vmem:[#allocation5 + $0x14] sm:$0xf]
        %v330 = vld [vmem:[#allocation5 + $0x18] sm:$0xf]
        %v331 = vld [vmem:[#allocation5 + $0x1c] sm:$0xf]
        %v336 = vunpack.c.l.b16 %v328
        %v337 = vunpack.c.l.b16 %v329
        %v338 = vunpack.c.l.b16 %v330
        %v339 = vunpack.c.l.b16 %v331
        %v340 = vpack.c.b16 %v337, %v336
        %v341 = vpack.c.b16 %v339, %v338
        %vm344 = vcmask 261120
        %v346 = vsel %vm344, %v321, 0
        %v349 = vsel %vm344, %v322, 0
        %351 = vmatprep.subr.bf16.mxu0 0
        %352 = vmatpush1.bf16.msra.mxu0 %v340
        %353 = vmatprep.subr.bf16.mxu0 0
        %354 = vmatpush1.bf16.msra.mxu0 %v341
        %355 = vmatprep.subr.bf16.mxu0 0
        %356 = vmatpush1.bf16.msra.mxu0 0
        %357 = vmatprep.subr.bf16.mxu0 0
        %358 = vmatpush1.bf16.msra.mxu0 0
        %359 = vmatprep.subr.bf16.mxu0 0
        %360 = vmatpush1.bf16.msra.mxu0 0
        %361 = vmatprep.subr.bf16.mxu0 0
        %362 = vmatpush1.bf16.msra.mxu0 0
        %363 = vmatprep.subr.bf16.mxu0 0
        %364 = vmatpush1.bf16.msra.mxu0 0
        %365 = vmatprep.subr.bf16.mxu0 0
        %366 = vmatpush1.bf16.msra.mxu0 0
        %367 = vmatprep.subr.bf16.mxu0 0
        %368 = vmatpush1.bf16.msra.mxu0 0
        %369 = vmatprep.subr.bf16.mxu0 0
        %370 = vmatpush1.bf16.msra.mxu0 0
        %371 = vmatprep.subr.bf16.mxu0 0
        %372 = vmatpush1.bf16.msra.mxu0 0
        %373 = vmatprep.subr.bf16.mxu0 0
        %374 = vmatpush1.bf16.msra.mxu0 0
        %375 = vmatprep.subr.bf16.mxu0 0
        %376 = vmatpush1.bf16.msra.mxu0 0
        %377 = vmatprep.subr.bf16.mxu0 0
        %378 = vmatpush1.bf16.msra.mxu0 0
        %379 = vmatprep.subr.bf16.mxu0 0
        %380 = vmatpush1.bf16.msra.mxu0 0
        %381 = vmatprep.subr.bf16.mxu0 0
        %382 = vmatpush1.bf16.msra.mxu0 0
        %383 = vmatprep.mubr.bf16.mxu0 0
        %384 = vmatmul.mubr.bf16.gmra.mrb[0].mxu0 %v346
        %v385 = vpop.f32.mrb[0].mxu0
        %v386 = vadd.f32 0.0, %v385
        %v387 = vpop.f32.mrb[0].mxu0
        %v388 = vpop.f32.mrb[0].mxu0
        %v389 = vadd.f32 0.0, %v388
        %v390 = vpop.f32.mrb[0].mxu0
        %391 = vmatprep.mubr.bf16.mxu0 0
        %392 = vmatmul.mubr.bf16.gmra.mrb[0].mxu0 %v349
        %v393 = vpop.f32.mrb[0].mxu0
        %v394 = vadd.f32 0.0, %v393
        %v395 = vpop.f32.mrb[0].mxu0
        %v396 = vpop.f32.mrb[0].mxu0
        %v397 = vadd.f32 0.0, %v396
        %v398 = vpop.f32.mrb[0].mxu0
        %399 = vdwg.mxu0
        %v400 = vld [vmem:[#allocation5] sm:$0xf]
        %v401 = vld [vmem:[#allocation5 + $0x4] sm:$0xf]
        %v402 = vld [vmem:[#allocation5 + $0x8] sm:$0xf]
        %v403 = vld [vmem:[#allocation5 + $0xc] sm:$0xf]
        %v408 = vunpack.c.l.b16 %v323
        %v409 = vunpack.c.l.b16 %v324
        %v410 = vunpack.c.l.b16 %v325
        %v411 = vunpack.c.l.b16 %v326
        %v412 = vrot.slane %v409, 7
        %vm413 = vcmask 1041409
        %v414 = vsel %vm413, %v412, %v408
        %v415 = vrot.slane %v410, 6
        %vm416 = vcmask 1042434
        %v417 = vsel %vm416, %v415, %v414
        %v418 = vrot.slane %v411, 5
        %vm419 = vcmask 1043459
        %v420 = vsel %vm419, %v418, %v417
        %v421 = vpack.c.b16 %v420, %v420
        %v426 = vunpack.c.l.b16 %v400
        %v427 = vunpack.c.l.b16 %v401
        %v428 = vunpack.c.l.b16 %v402
        %v429 = vunpack.c.l.b16 %v403
        %v430 = vpack.c.b16 %v427, %v426
        %v431 = vpack.c.b16 %v429, %v428
        %v435 = vsel %vm344, %v421, 0
        %437 = vmatprep.subr.bf16.mxu0 0
        %438 = vmatpush1.bf16.msra.mxu0 %v430
        %439 = vmatprep.subr.bf16.mxu0 0
        %440 = vmatpush1.bf16.msra.mxu0 %v431
        %441 = vmatprep.subr.bf16.mxu0 0
        %442 = vmatpush1.bf16.msra.mxu0 0
        %443 = vmatprep.subr.bf16.mxu0 0
        %444 = vmatpush1.bf16.msra.mxu0 0
        %445 = vmatprep.subr.bf16.mxu0 0
        %446 = vmatpush1.bf16.msra.mxu0 0
        %447 = vmatprep.subr.bf16.mxu0 0
        %448 = vmatpush1.bf16.msra.mxu0 0
        %449 = vmatprep.subr.bf16.mxu0 0
        %450 = vmatpush1.bf16.msra.mxu0 0
        %451 = vmatprep.subr.bf16.mxu0 0
        %452 = vmatpush1.bf16.msra.mxu0 0
        %453 = vmatprep.subr.bf16.mxu0 0
        %454 = vmatpush1.bf16.msra.mxu0 0
        %455 = vmatprep.subr.bf16.mxu0 0
        %456 = vmatpush1.bf16.msra.mxu0 0
        %457 = vmatprep.subr.bf16.mxu0 0
        %458 = vmatpush1.bf16.msra.mxu0 0
        %459 = vmatprep.subr.bf16.mxu0 0
        %460 = vmatpush1.bf16.msra.mxu0 0
        %461 = vmatprep.subr.bf16.mxu0 0
        %462 = vmatpush1.bf16.msra.mxu0 0
        %463 = vmatprep.subr.bf16.mxu0 0
        %464 = vmatpush1.bf16.msra.mxu0 0
        %465 = vmatprep.subr.bf16.mxu0 0
        %466 = vmatpush1.bf16.msra.mxu0 0
        %467 = vmatprep.subr.bf16.mxu0 0
        %468 = vmatpush1.bf16.msra.mxu0 0
        %469 = vmatprep.mubr.bf16.mxu0 0
        %470 = vmatmul.mubr.bf16.gmra.mrb[0].mxu0 %v435
        %v471 = vpop.f32.mrb[0].mxu0
        %v472 = vadd.f32 0.0, %v471
        %v473 = vpop.f32.mrb[0].mxu0
        %v474 = vpop.f32.mrb[0].mxu0
        %v475 = vpop.f32.mrb[0].mxu0
        %476 = vdwg.mxu0
        %v479 = vunpack.c.l.s4 1966171168
        %v480 = vunpack.c.0.s8 %v479
        %v481 = vlaneseq
        %v482 = vshrl.u32 %v481, 7
        %v483 = vsub.s32 %v480, %v482
        %v484 = vrot.slane %v472, %v483
        %v485 = vcombine.high %v484, %v484
        %v487 = vunpack.c.l.s4 1966171168
        %v488 = vunpack.c.0.s8 %v487
        %v489 = vlaneseq
        %v490 = vshrl.u32 %v489, 7
        %v491 = vsub.s32 %v488, %v490
        %v492 = vrot.slane %v484, %v491
        %v494 = vunpack.c.l.s4 1966171168
        %v495 = vunpack.c.0.s8 %v494
        %v496 = vlaneseq
        %v497 = vshrl.u32 %v496, 7
        %v498 = vsub.s32 %v495, %v497
        %v499 = vrot.slane %v485, %v498
        %v500 = vcombine.high %v492, %v492
        %v501 = vcombine.high %v499, %v499
        %v502 = vlaneseq
        %v503 = vshrl.u32 %v502, 7
        %v504 = vsub.s32 0, %v503
        %v505 = vrot.slane %v492, %v504
        %v506 = vlaneseq
        %v507 = vshrl.u32 %v506, 7
        %v508 = vsub.s32 0, %v507
        %v509 = vrot.slane %v499, %v508
        %v510 = vlaneseq
        %v511 = vshrl.u32 %v510, 7
        %v512 = vsub.s32 0, %v511
        %v513 = vrot.slane %v500, %v512
        %v514 = vlaneseq
        %v515 = vshrl.u32 %v514, 7
        %v516 = vsub.s32 0, %v515
        %v517 = vrot.slane %v501, %v516
        %v522 = vadd.f32 %v386, %v505
        %v523 = vadd.f32 %v389, %v509
        %v524 = vadd.f32 %v394, %v513
        %v525 = vadd.f32 %v397, %v517
        %v526 = vlaneseq
        %v527 = vshrl.u32 %v526, 7
        %v528 = vsub.s32 0, %v527
        %v529 = vrot.slane %v327, %v528
        %v530 = vadd.f32 %v522, %v529
        %v531 = vadd.f32 %v523, %v529
        %v532 = vadd.f32 %v524, %v529
        %v533 = vadd.f32 %v525, %v529
        %v534 = vmax.f32 %v530, 0.0
        %v535 = vmax.f32 %v531, 0.0
        %v536 = vmax.f32 %v532, 0.0
        %v537 = vmax.f32 %v533, 0.0
        %v538 = vlaneseq
        %v539 = vshrl.u32 %v538, 7
        %v540 = vsub.s32 1, %v539
        %v541 = vrot.slane %v327, %v540
        %v542 = vmul.f32 %v534, %v541
        %v543 = vmul.f32 %v535, %v541
        %v544 = vmul.f32 %v536, %v541
        %v545 = vmul.f32 %v537, %v541
        %546 = vadd.xlane.f32.xlu0 %v542
        %v547 = vpop.xlane.xlu0 %546
        %548 = vadd.xlane.f32.xlu0 %v543
        %v549 = vpop.xlane.xlu0 %548
        %550 = vadd.xlane.f32.xlu0 %v544
        %v551 = vpop.xlane.xlu0 %550
        %552 = vadd.xlane.f32.xlu0 %v545
        %v553 = vpop.xlane.xlu0 %552
        %v554 = vlaneseq
        %v555 = vshrl.u32 %v554, 7
        %v556 = vsub.s32 2, %v555
        %v557 = vrot.slane %v327, %v556
        %v558 = vadd.f32 %v547, %v557
        %v559 = vadd.f32 %v549, %v557
        %v560 = vadd.f32 %v551, %v557
        %v561 = vadd.f32 %v553, %v557
        %v562 = vxor.u32 %v558, 2147483648
        %v563 = vxor.u32 %v559, 2147483648
        %v564 = vxor.u32 %v560, 2147483648
        %v565 = vxor.u32 %v561, 2147483648
        %v566 = vmul.f32 %v562, 1.442695
        %v567 = vpow.pop %v566
        %v568 = vmul.f32 %v563, 1.442695
        %v569 = vpow.pop %v568
        %v570 = vmul.f32 %v564, 1.442695
        %v571 = vpow.pop %v570
        %v572 = vmul.f32 %v565, 1.442695
        %v573 = vpow.pop %v572
        %v574 = vadd.f32 %v567, 1.0
        %v575 = vadd.f32 %v569, 1.0
        %v576 = vadd.f32 %v571, 1.0
        %v577 = vadd.f32 %v573, 1.0
        %v578 = vrcp.pop %v574
        %v579 = vmul.f32 1.0, %v578
        %v580 = vrcp.pop %v575
        %v581 = vmul.f32 1.0, %v580
        %v582 = vrcp.pop %v576
        %v583 = vmul.f32 1.0, %v582
        %v584 = vrcp.pop %v577
        %v585 = vmul.f32 1.0, %v584
        %v586 = vlaneseq
        %v587 = vshrl.u32 %v586, 7
        %vm588 = vcmp.ge.s32.totalorder %v587, 1
        %v589 = vsel %vm588, %v579, 0.0
        %v590 = vsel %vm588, %v581, 0.0
        %v591 = vsel %vm588, %v583, 0.0
        %v592 = vsel %vm588, %v585, 0.0
        %vm593 = vcmask 7168
        %v594 = vsel %vm593, %v589, 0.0
        %v595 = vrot.slane %v594, 4
        %v596 = vadd.f32 %v594, %v595
        %v597 = vrot.slane %v596, 2
        %v598 = vadd.f32 %v596, %v597
        %v599 = vrot.slane %v598, 1
        %v600 = vadd.f32 %v598, %v599
        %v601 = vsel %vm593, %v590, 0.0
        %v602 = vrot.slane %v601, 4
        %v603 = vadd.f32 %v601, %v602
        %v604 = vrot.slane %v603, 2
        %v605 = vadd.f32 %v603, %v604
        %v606 = vrot.slane %v605, 1
        %v607 = vadd.f32 %v605, %v606
        %v608 = vsel %vm593, %v591, 0.0
        %v609 = vrot.slane %v608, 4
        %v610 = vadd.f32 %v608, %v609
        %v611 = vrot.slane %v610, 2
        %v612 = vadd.f32 %v610, %v611
        %v613 = vrot.slane %v612, 1
        %v614 = vadd.f32 %v612, %v613
        %v615 = vsel %vm593, %v592, 0.0
        %v616 = vrot.slane %v615, 4
        %v617 = vadd.f32 %v615, %v616
        %v618 = vrot.slane %v617, 2
        %v619 = vadd.f32 %v617, %v618
        %v620 = vrot.slane %v619, 1
        %v621 = vadd.f32 %v619, %v620
        %vm622 = vcmp.gt.f32.partialorder %v600, 0.0
        %vm623 = vcmp.gt.f32.partialorder %v607, 0.0
        %vm624 = vcmp.gt.f32.partialorder %v614, 0.0
        %vm625 = vcmp.gt.f32.partialorder %v621, 0.0
        %v626 = vsel %vm622, %v600, 1.0
        %v627 = vsel %vm623, %v607, 1.0
        %v628 = vsel %vm624, %v614, 1.0
        %v629 = vsel %vm625, %v621, 1.0
        %v630 = vrcp.pop %v626
        %v631 = vmul.f32 %v589, %v630
        %v632 = vrcp.pop %v627
        %v633 = vmul.f32 %v590, %v632
        %v634 = vrcp.pop %v628
        %v635 = vmul.f32 %v591, %v634
        %v636 = vrcp.pop %v629
        %v637 = vmul.f32 %v592, %v636
        %639 = vset.pattern.permute.xlu0 0
        %640 = vperm.xlu0 %639, %v631
        %v641 = vpop.permute.xlu0 %640
        %644 = vset.pattern.permute.xlu0 0
        %645 = vperm.xlu0 %644, %v633
        %v646 = vpop.permute.xlu0 %645
        %649 = vset.pattern.permute.xlu0 0
        %650 = vperm.xlu0 %649, %v635
        %v651 = vpop.permute.xlu0 %650
        %654 = vset.pattern.permute.xlu0 0
        %655 = vperm.xlu0 %654, %v637
        %v656 = vpop.permute.xlu0 %655
        %v658 = vmul.f32 %v317, %v641
        %v659 = vmul.f32 %v318, %v646
        %v660 = vmul.f32 %v319, %v651
        %v661 = vmul.f32 %v320, %v656
        %v662 = vsel %vm344, %v658, 0.0
        %v663 = vrot.slane %v662, 4
        %v664 = vadd.f32 %v662, %v663
        %v665 = vrot.slane %v664, 2
        %v666 = vadd.f32 %v664, %v665
        %v667 = vrot.slane %v666, 1
        %v668 = vadd.f32 %v666, %v667
        %v669 = vsel %vm344, %v659, 0.0
        %v670 = vrot.slane %v669, 4
        %v671 = vadd.f32 %v669, %v670
        %v672 = vrot.slane %v671, 2
        %v673 = vadd.f32 %v671, %v672
        %v674 = vrot.slane %v673, 1
        %v675 = vadd.f32 %v673, %v674
        %v676 = vsel %vm344, %v660, 0.0
        %v677 = vrot.slane %v676, 4
        %v678 = vadd.f32 %v676, %v677
        %v679 = vrot.slane %v678, 2
        %v680 = vadd.f32 %v678, %v679
        %v681 = vrot.slane %v680, 1
        %v682 = vadd.f32 %v680, %v681
        %v683 = vsel %vm344, %v661, 0.0
        %v684 = vrot.slane %v683, 4
        %v685 = vadd.f32 %v683, %v684
        %v686 = vrot.slane %v685, 2
        %v687 = vadd.f32 %v685, %v686
        %v688 = vrot.slane %v687, 1
        %v689 = vadd.f32 %v687, %v688
        %v690 = vpack.c.bf16 %v668, %v668
        %v691 = vpack.c.bf16 %v675, %v675
        %v692 = vpack.c.bf16 %v682, %v682
        %v693 = vpack.c.bf16 %v689, %v689
        %v694 = vld [vmem:[#allocation7] sm:$0xf]
        %v695 = vld [vmem:[#allocation7 + $0x4] sm:$0xf]
        %v696 = vld [vmem:[#allocation7 + $0x8] sm:$0xf]
        %v697 = vld [vmem:[#allocation7 + $0xc] sm:$0xf]
        %v698 = vld [vmem:[#allocation7 + $0x10] sm:$0xf]
        %v699 = vld [vmem:[#allocation7 + $0x14] sm:$0xf]
        %v700 = vld [vmem:[#allocation7 + $0x18] sm:$0xf]
        %v701 = vld [vmem:[#allocation7 + $0x1c] sm:$0xf]
        %v706 = vunpack.c.l.b16 %v690
        %v707 = vunpack.c.l.b16 %v691
        %v708 = vunpack.c.l.b16 %v692
        %v709 = vunpack.c.l.b16 %v693
        %v710 = vsel %vm413, %v707, %v706
        %v711 = vsel %vm416, %v708, %v710
        %v712 = vsel %vm419, %v709, %v711
        %v713 = vpack.c.b16 %v712, %v712
        %v718 = vunpack.c.l.b16 %v698
        %v719 = vunpack.c.l.b16 %v699
        %v720 = vunpack.c.l.b16 %v700
        %v721 = vunpack.c.l.b16 %v701
        %v722 = vpack.c.b16 %v719, %v718
        %v723 = vpack.c.b16 %v721, %v720
        %v727 = vsel %vm344, %v713, 0
        %729 = vmatprep.subr.bf16.mxu0 0
        %730 = vmatpush1.bf16.msra.mxu0 %v722
        %731 = vmatprep.subr.bf16.mxu0 0
        %732 = vmatpush1.bf16.msra.mxu0 %v723
        %733 = vmatprep.subr.bf16.mxu0 0
        %734 = vmatpush1.bf16.msra.mxu0 0
        %735 = vmatprep.subr.bf16.mxu0 0
        %736 = vmatpush1.bf16.msra.mxu0 0
        %737 = vmatprep.subr.bf16.mxu0 0
        %738 = vmatpush1.bf16.msra.mxu0 0
        %739 = vmatprep.subr.bf16.mxu0 0
        %740 = vmatpush1.bf16.msra.mxu0 0
        %741 = vmatprep.subr.bf16.mxu0 0
        %742 = vmatpush1.bf16.msra.mxu0 0
        %743 = vmatprep.subr.bf16.mxu0 0
        %744 = vmatpush1.bf16.msra.mxu0 0
        %745 = vmatprep.subr.bf16.mxu0 0
        %746 = vmatpush1.bf16.msra.mxu0 0
        %747 = vmatprep.subr.bf16.mxu0 0
        %748 = vmatpush1.bf16.msra.mxu0 0
        %749 = vmatprep.subr.bf16.mxu0 0
        %750 = vmatpush1.bf16.msra.mxu0 0
        %751 = vmatprep.subr.bf16.mxu0 0
        %752 = vmatpush1.bf16.msra.mxu0 0
        %753 = vmatprep.subr.bf16.mxu0 0
        %754 = vmatpush1.bf16.msra.mxu0 0
        %755 = vmatprep.subr.bf16.mxu0 0
        %756 = vmatpush1.bf16.msra.mxu0 0
        %757 = vmatprep.subr.bf16.mxu0 0
        %758 = vmatpush1.bf16.msra.mxu0 0
        %759 = vmatprep.subr.bf16.mxu0 0
        %760 = vmatpush1.bf16.msra.mxu0 0
        %761 = vmatprep.mubr.bf16.mxu0 0
        %762 = vmatmul.mubr.bf16.gmra.mrb[0].mxu0 %v727
        %v763 = vpop.f32.mrb[0].mxu0
        %v764 = vadd.f32 0.0, %v763
        %v765 = vpop.f32.mrb[0].mxu0
        %v766 = vpop.f32.mrb[0].mxu0
        %v767 = vpop.f32.mrb[0].mxu0
        %768 = vdwg.mxu0
        %v773 = vunpack.c.l.b16 %v694
        %v774 = vunpack.c.l.b16 %v695
        %v775 = vunpack.c.l.b16 %v696
        %v776 = vunpack.c.l.b16 %v697
        %v777 = vpack.c.b16 %v774, %v773
        %v778 = vpack.c.b16 %v776, %v775
        %781 = vmatprep.subr.bf16.mxu0 0
        %782 = vmatpush1.bf16.msra.mxu0 %v777
        %783 = vmatprep.subr.bf16.mxu0 0
        %784 = vmatpush1.bf16.msra.mxu0 %v778
        %785 = vmatprep.subr.bf16.mxu0 0
        %786 = vmatpush1.bf16.msra.mxu0 0
        %787 = vmatprep.subr.bf16.mxu0 0
        %788 = vmatpush1.bf16.msra.mxu0 0
        %789 = vmatprep.subr.bf16.mxu0 0
        %790 = vmatpush1.bf16.msra.mxu0 0
        %791 = vmatprep.subr.bf16.mxu0 0
        %792 = vmatpush1.bf16.msra.mxu0 0
        %793 = vmatprep.subr.bf16.mxu0 0
        %794 = vmatpush1.bf16.msra.mxu0 0
        %795 = vmatprep.subr.bf16.mxu0 0
        %796 = vmatpush1.bf16.msra.mxu0 0
        %797 = vmatprep.subr.bf16.mxu0 0
        %798 = vmatpush1.bf16.msra.mxu0 0
        %799 = vmatprep.subr.bf16.mxu0 0
        %800 = vmatpush1.bf16.msra.mxu0 0
        %801 = vmatprep.subr.bf16.mxu0 0
        %802 = vmatpush1.bf16.msra.mxu0 0
        %803 = vmatprep.subr.bf16.mxu0 0
        %804 = vmatpush1.bf16.msra.mxu0 0
        %805 = vmatprep.subr.bf16.mxu0 0
        %806 = vmatpush1.bf16.msra.mxu0 0
        %807 = vmatprep.subr.bf16.mxu0 0
        %808 = vmatpush1.bf16.msra.mxu0 0
        %809 = vmatprep.subr.bf16.mxu0 0
        %810 = vmatpush1.bf16.msra.mxu0 0
        %811 = vmatprep.subr.bf16.mxu0 0
        %812 = vmatpush1.bf16.msra.mxu0 0
        %813 = vmatprep.mubr.bf16.mxu0 0
        %814 = vmatmul.mubr.bf16.gmra.mrb[0].mxu0 %v435
        %v815 = vpop.f32.mrb[0].mxu0
        %v816 = vadd.f32 %v764, %v815
        %v817 = vpop.f32.mrb[0].mxu0
        %v818 = vpop.f32.mrb[0].mxu0
        %v819 = vpop.f32.mrb[0].mxu0
        %820 = vdwg.mxu0
        %v821 = vld [vmem:[%s5] sm:$0x7]
        %v822 = vlaneseq
        %v823 = vshrl.u32 %v822, 7
        %v824 = vsub.s32 0, %v823
        %v825 = vrot.slane %v821, %v824
        %v826 = vadd.f32 %v816, %v825
        %v827 = vxor.u32 %v826, 2147483648
        %v828 = vmul.f32 %v827, 1.442695
        %v829 = vpow.pop %v828
        %v830 = vadd.f32 %v829, 1.0
        %v831 = vrcp.pop %v830
        %v832 = vmul.f32 1.0, %v831
        %v833 = vlaneseq
        %v834 = vshrl.u32 %v833, 7
        %v835 = vsub.s32 1, %v834
        %v836 = vrot.slane %v821, %v835
        %838 = vrot.lane.b32.xlu0 %v836, 32
        %v839 = vpop.permute.xlu0 %838
        %v841 = vadd.f32 %v816, %v839
        %v842 = vmax.f32 %v841, 0.0
        %v843 = vpack.c.bf16 %v842, %v842
        %v844 = vld [vmem:[#allocation8] sm:$0xf]
        %v845 = vld [vmem:[#allocation8 + $0x4] sm:$0xf]
        %v846 = vld [vmem:[#allocation8 + $0x8] sm:$0xf]
        %v847 = vld [vmem:[#allocation8 + $0xc] sm:$0xf]
        %v848 = vlaneseq
        %v849 = vshrl.u32 %v848, 7
        %v850 = vsub.s32 2, %v849
        %v851 = vrot.slane %v821, %v850
        %853 = vrot.lane.b32.xlu0 %v843, 96
        %v854 = vpop.permute.xlu0 %853
        %v859 = vunpack.c.l.b16 %v844
        %v860 = vunpack.c.l.b16 %v845
        %v861 = vunpack.c.l.b16 %v846
        %v862 = vunpack.c.l.b16 %v847
        %v863 = vpack.c.b16 %v860, %v859
        %v864 = vpack.c.b16 %v862, %v861
        %v868 = vsel %vm344, %v854, 0
        %870 = vmatprep.subr.bf16.mxu0 0
        %871 = vmatpush1.bf16.msra.mxu0 %v863
        %872 = vmatprep.subr.bf16.mxu0 0
        %873 = vmatpush1.bf16.msra.mxu0 %v864
        %874 = vmatprep.subr.bf16.mxu0 0
        %875 = vmatpush1.bf16.msra.mxu0 0
        %876 = vmatprep.subr.bf16.mxu0 0
        %877 = vmatpush1.bf16.msra.mxu0 0
        %878 = vmatprep.subr.bf16.mxu0 0
        %879 = vmatpush1.bf16.msra.mxu0 0
        %880 = vmatprep.subr.bf16.mxu0 0
        %881 = vmatpush1.bf16.msra.mxu0 0
        %882 = vmatprep.subr.bf16.mxu0 0
        %883 = vmatpush1.bf16.msra.mxu0 0
        %884 = vmatprep.subr.bf16.mxu0 0
        %885 = vmatpush1.bf16.msra.mxu0 0
        %886 = vmatprep.subr.bf16.mxu0 0
        %887 = vmatpush1.bf16.msra.mxu0 0
        %888 = vmatprep.subr.bf16.mxu0 0
        %889 = vmatpush1.bf16.msra.mxu0 0
        %890 = vmatprep.subr.bf16.mxu0 0
        %891 = vmatpush1.bf16.msra.mxu0 0
        %892 = vmatprep.subr.bf16.mxu0 0
        %893 = vmatpush1.bf16.msra.mxu0 0
        %894 = vmatprep.subr.bf16.mxu0 0
        %895 = vmatpush1.bf16.msra.mxu0 0
        %896 = vmatprep.subr.bf16.mxu0 0
        %897 = vmatpush1.bf16.msra.mxu0 0
        %898 = vmatprep.subr.bf16.mxu0 0
        %899 = vmatpush1.bf16.msra.mxu0 0
        %900 = vmatprep.subr.bf16.mxu0 0
        %901 = vmatpush1.bf16.msra.mxu0 0
        %902 = vmatprep.mubr.bf16.mxu0 0
        %903 = vmatmul.mubr.bf16.gmra.mrb[0].mxu0 %v868
        %v904 = vpop.f32.mrb[0].mxu0
        %v905 = vadd.f32 %v851, %v904
        %v906 = vpop.f32.mrb[0].mxu0
        %v907 = vpop.f32.mrb[0].mxu0
        %v908 = vpop.f32.mrb[0].mxu0
        %909 = vdwg.mxu0
        %v910 = vmul.f32 %v832, %v905
        %v912 = vrot.slane %v910, 1
        %v913 = vrot.slane %v910, 2
        %v914 = vrot.slane %v910, 3
        %v919 = vadd.f32 %v317, %v910
        %v920 = vadd.f32 %v318, %v912
        %v921 = vadd.f32 %v319, %v913
        %v922 = vadd.f32 %v320, %v914
        %vm923 = vcmp.eq.s32.totalorder %v587, 0
        %v924 = vsel %vm923, 1, 0
        %vm925 = vcmp.eq.s32.totalorder %v924, 1
        %v926 = vlaneseq
        %v927 = vshrl.u32 %v926, 7
        %v928 = vsub.s32 0, %v927
        %v929 = vrot.slane %v919, %v928
        %v930 = vlaneseq
        %v931 = vshrl.u32 %v930, 7
        %v932 = vsub.s32 0, %v931
        %v933 = vrot.slane %v920, %v932
        %v934 = vlaneseq
        %v935 = vshrl.u32 %v934, 7
        %v936 = vsub.s32 0, %v935
        %v937 = vrot.slane %v921, %v936
        %v938 = vlaneseq
        %v939 = vshrl.u32 %v938, 7
        %v940 = vsub.s32 0, %v939
        %v941 = vrot.slane %v922, %v940
        %v942 = vsel %vm925, %v929, %v317
        %v943 = vsel %vm925, %v933, %v318
        %v944 = vsel %vm925, %v937, %v319
        %v945 = vsel %vm925, %v941, %v320
        %946 = vst.msk [vmem:[%s313] sm:$0xff] %vm344, %v942
        %947 = vst.msk [vmem:[%s313 + $0x8] sm:$0xff] %vm344, %v943
        %948 = vst.msk [vmem:[%s313 + $0x10] sm:$0xff] %vm344, %v944
        %949 = vst.msk [vmem:[%s313 + $0x18] sm:$0xff] %vm344, %v945
        %s950 = sand.u32 %s164, 1
        %s951 = scalar_lea.sflag [#allocation4], %s950
        %s952 = sand.u32 %s164, 1
        %s953 = smul.addr %s952, 32
        %s954 = scalar_lea.vmem [#allocation10], %s953
        // Predicated region
        $region61: #{tpu_custom_call.1} parent=43 // pred_check
          %p955 = pneg %p174
        $region62: #{tpu_custom_call.1} parent=43 // pred_check_branch
          %957 = sbr.rel (%p955) target = $region64
        $region63: #{tpu_custom_call.1} parent=43 // pred_region
          %s958 = smul.u32 4, %s25
          %s960 = ssub.s32 512, 512
          %961 = vsyncadd %s951, %s960
          %s962 = smul.addr %s958, 128
          %s963 = scalar_lea.hbm %s6, %s962
          %s964 = sshll.u32 %s954, 4
          %s965 = int_to_ptr.vmem [resolvable:$true] %s964
          %970 = dma.vmem_to_hbm [thread:$0]  %s965, 512, %s963, %s951, 128, 128, 8
        $region64: #{tpu_custom_call.1} parent=43 // pred_fallthru
          _
      $region44: #{tpu_custom_call.1} parent=5 // pred_fallthru
        _
      %p971 = scmp.le.s32.totalorder 2, %s20
      // Predicated region
      $region65: #{tpu_custom_call.1} parent=5 // pred_check
        %p972 = pneg %p971
      $region66: #{tpu_custom_call.1} parent=5 // pred_check_branch
        %974 = sbr.rel (%p972) target = $region68
      $region67: #{tpu_custom_call.1} parent=5 // pred_region
        %s975 = ssub.s32 %s20, 2
        // Predicated region
        $region69: #{tpu_custom_call.1} parent=67 // pred_check
          %p976 = pneg %p180
        $region70: #{tpu_custom_call.1} parent=67 // pred_check_branch
          %978 = sbr.rel (%p976) target = $region72
        $region71: #{tpu_custom_call.1} parent=67 // pred_region
          %s979 = sand.u32 %s165, 1
          %s980 = scalar_lea.sflag [#allocation4], %s979
          %s981 = sand.u32 %s165, 1
          %s982 = smul.addr %s981, 32
          %s983 = scalar_lea.vmem [#allocation10], %s982
          %984 = dma.done %s980, 512
        $region72: #{tpu_custom_call.1} parent=67 // pred_fallthru
          _
      $region68: #{tpu_custom_call.1} parent=5 // pred_fallthru
        _
    $region6: #{tpu_custom_call.1} parent=1 // loop_footer
      %s24 = sadd.s32 1, %s20
    $region7: #{tpu_custom_call.1} parent=1 // loop_footer_branch
      %19 = sbr.rel target = $region3
    $region8: #{tpu_custom_call.1} parent=1 // loop_exit
      _
    %985 = vsyncpa [#allocation3], 1
    %s986 = scalar_lea.sflag [#allocation3], 1
    %987 = vsyncpa %s986, 1
    %988 = vsyncpa [#allocation6], 1
    %989 = vsyncpa [#allocation9], 1
    %990 = vsyncpa [#allocation4], 1
    %s991 = scalar_lea.sflag [#allocation4], 1
    %992 = vsyncpa %s991, 1

</llo_original>
